<compile_context>
chip_gen: v5e
topology: v5e:2x2
jax: 0.10.0
libtpu: 0.0.40
codegen_flags: <defaults>
</compile_context>

<pallas_src>
import jax
import jax.numpy as jnp
from jax.experimental import pallas as pl
from jax.experimental.pallas import tpu as pltpu


def _invconv_kernel(w_ref, b_ref, x_ref, o_ref):
    # w_ref: (C, C)       resident weight (out = W @ x, no transpose)
    # b_ref: (C, 1)       resident bias, broadcasts along lanes
    # x_ref: (Bn, C, TL)  batch block; channels on sublanes, spatial on lanes
    # o_ref: (Bn, C, TL)
    w = w_ref[...]
    b = b_ref[...]
    for i in range(x_ref.shape[0]):  # static unroll over the small batch block
        o_ref[i] = (
            jnp.dot(w, x_ref[i], preferred_element_type=jnp.float32) + b
        ).astype(o_ref.dtype)


def _vmem_budgets():
    """Per-generation sizing: (vmem_limit_bytes, per_tile_buffer_budget_bytes)."""
    try:
        cap = pltpu.get_tpu_info().vmem_capacity_bytes
    except Exception:
        cap = 64 * 1024 * 1024  # unknown -> assume the small (v7x-class) VMEM
    if cap >= 128 * 1024 * 1024:  # v5e / v6e: 128 MiB physical VMEM
        return 96 * 1024 * 1024, 16 * 1024 * 1024
    # v7x: 64 MiB physical -> keep 4 double-buffered tiles + weight well under it
    return 44 * 1024 * 1024, 8 * 1024 * 1024


def _choose_blocks(n, c, hw, itemsize, per_buffer_budget):
    """Pick (batch_block Bn, lane_tile TL).

    x/out tiles are each double-buffered -> ~4 live (Bn, C, TL) buffers, each
    capped at `per_buffer_budget` bytes.  No artificial lane cap: TL is as big
    as the budget (and HW) allow, rounded to a 128-lane multiple.  Small-C
    workloads batch several images per grid step to raise bytes-per-DMA.
    """
    bn = min(n, max(1, 128 // c), 8) if c <= 16 else 1
    max_tl = max(128, per_buffer_budget // (bn * c * itemsize))
    if hw <= 128:
        tl = hw  # block spans the full lane extent (equal-to-array-dim is allowed)
    else:
        tl = min((hw // 128) * 128, (max_tl // 128) * 128)
        tl = max(128, tl)
    return bn, tl


def invconv2d_forward(x_nchw, weight, bias):
    """Forward of InvConv2d.

    x_nchw : (N, C, H, W) float32
    weight : (C, C)       float32   (the (C, C, 1, 1) conv weight, squeezed)
    bias   : (C,)         float32   (the (1, C, 1, 1) bias, squeezed)
    returns: (N, C, H, W) float32
    """
    N, C, H, W = x_nchw.shape
    HW = H * W
    itemsize = jnp.dtype(x_nchw.dtype).itemsize

    vmem_limit, per_buffer = _vmem_budgets()
    bn, tl = _choose_blocks(N, C, HW, itemsize, per_buffer)
    num_tiles = -(-HW // tl)   # cdiv; ragged last tile handled by edge masking
    num_bblk = -(-N // bn)     # cdiv; ragged last batch block likewise

    x3 = x_nchw.reshape(N, C, HW)  # free view; NO transpose, NO pad
    bias2d = bias.reshape(C, 1)

    flops = 2 * N * HW * C * C
    bytes_accessed = (2 * N * HW * C + C * C + C) * itemsize

    out3 = pl.pallas_call(
        _invconv_kernel,
        out_shape=jax.ShapeDtypeStruct((N, C, HW), x3.dtype),
        grid_spec=pltpu.PrefetchScalarGridSpec(
            num_scalar_prefetch=0,
            grid=(num_tiles, num_bblk),  # big (spatial) axis first -> robust megacore split
            in_specs=[
                pl.BlockSpec((C, C), lambda j, n: (0, 0)),            # weight, resident
                pl.BlockSpec((C, 1), lambda j, n: (0, 0)),            # bias, resident
                pl.BlockSpec((bn, C, tl), lambda j, n: (n, 0, j)),    # x tile (lanes = spatial)
            ],
            out_specs=pl.BlockSpec((bn, C, tl), lambda j, n: (n, 0, j)),
        ),
        compiler_params=pltpu.CompilerParams(
            dimension_semantics=("parallel", "parallel"),
            vmem_limit_bytes=vmem_limit,
        ),
        cost_estimate=pl.CostEstimate(
            flops=flops, transcendentals=0, bytes_accessed=bytes_accessed
        ),
    )(weight, bias2d, x3)

    return out3.reshape(N, C, H, W)


def make_params(key, channel):
    """Deterministic parameter init matching InvConv2d.__init__ semantics:
    random square matrix -> QR -> orthogonal weight; random bias."""
    k_w, k_b = jax.random.split(key)
    w0 = jax.random.normal(k_w, (channel, channel), dtype=jnp.float32)
    q, _ = jnp.linalg.qr(w0)  # orthogonal (C, C) weight
    bias = jax.random.normal(k_b, (channel,), dtype=jnp.float32)
    return q, bias


def _reference(x, weight, bias):
    C = weight.shape[0]
    return jnp.einsum("oc,nchw->nohw", weight, x) + bias.reshape(1, C, 1, 1)


if __name__ == "__main__":
    key = jax.random.PRNGKey(0)
    k_x, k_p, k_x2, k_x3, k_p3 = jax.random.split(key, 5)

    # Shape from the module spec: small batch, tiny channel count.
    N, C, H, W = 2, 4, 16, 16
    x = jax.random.normal(k_x, (N, C, H, W), dtype=jnp.float32)
    weight, bias = make_params(k_p, C)
    out = jax.block_until_ready(invconv2d_forward(x, weight, bias))
    assert out.shape == (N, C, H, W)
    assert jnp.allclose(out, _reference(x, weight, bias), atol=1e-5, rtol=1e-5)

    # Ragged spatial extent (H*W not a multiple of 128) -> exercises edge-block
    # write masking instead of the old pad/slice path.
    x2 = jax.random.normal(k_x2, (3, C, 13, 13), dtype=jnp.float32)
    out2 = jax.block_until_ready(invconv2d_forward(x2, weight, bias))
    assert out2.shape == x2.shape
    assert jnp.allclose(out2, _reference(x2, weight, bias), atol=1e-5, rtol=1e-5)

    # Larger channel count -> exercises the bn=1 / multi-batch-block grid path.
    C3 = 32
    w3, b3 = make_params(k_p3, C3)
    x3 = jax.random.normal(k_x3, (2, C3, 16, 16), dtype=jnp.float32)
    out3 = jax.block_until_ready(invconv2d_forward(x3, w3, b3))
    assert out3.shape == x3.shape
    assert jnp.allclose(out3, _reference(x3, w3, b3), atol=1e-5, rtol=1e-5)

    print("KERNEL_OK")
</pallas_src>

<mosaic_0001>
module attributes {stable_mosaic.version = 11 : i64} {
  func.func @_invconv_kernel(%arg0: i32, %arg1: i32, %arg2: memref<4x4xf32, #tpu.memory_space<vmem>>, %arg3: memref<4x1xf32, #tpu.memory_space<vmem>>, %arg4: memref<2x4x256xf32, #tpu.memory_space<vmem>>, %arg5: memref<2x4x256xf32, #tpu.memory_space<vmem>>) attributes {dimension_semantics = [#tpu.dimension_semantics<parallel>, #tpu.dimension_semantics<parallel>], iteration_bounds = array<i64: 1, 1>, scalar_prefetch = 0 : i64, scratch_operands = 0 : i64, tpu.core_type = #tpu.core_type<tc>, window_params = [{pipeline_mode = #tpu.pipeline_mode<synchronous>, transform_indices = @transform_0, window_bounds = array<i64: 4, 4>}, {pipeline_mode = #tpu.pipeline_mode<synchronous>, transform_indices = @transform_1, window_bounds = array<i64: 4, 1>}, {transform_indices = @transform_2, window_bounds = array<i64: 2, 4, 256>}, {transform_indices = @transform_3, window_bounds = array<i64: 2, 4, 256>}]} {
    %c0 = arith.constant 0 : index
    %c0_0 = arith.constant 0 : index
    %0 = vector.load %arg2[%c0, %c0_0] : memref<4x4xf32, #tpu.memory_space<vmem>>, vector<4x4xf32>
    %c0_1 = arith.constant 0 : index
    %c0_2 = arith.constant 0 : index
    %1 = vector.load %arg3[%c0_1, %c0_2] : memref<4x1xf32, #tpu.memory_space<vmem>>, vector<4x1xf32>
    %c0_3 = arith.constant 0 : index
    %c0_4 = arith.constant 0 : index
    %c0_5 = arith.constant 0 : index
    %2 = vector.load %arg4[%c0_3, %c0_4, %c0_5] : memref<2x4x256xf32, #tpu.memory_space<vmem>>, vector<1x4x256xf32>
    %3 = vector.shape_cast %2 : vector<1x4x256xf32> to vector<4x256xf32>
    %cst = arith.constant dense<0.000000e+00> : vector<4x256xf32>
    %4 = tpu.matmul %0, %3, %cst {dimension_numbers = #tpu.dot_dimension_numbers<[1], [0], [0], [1], [0, 0, 1, 1], [], []>} : vector<4x4xf32>, vector<4x256xf32>, vector<4x256xf32> -> vector<4x256xf32>
    %5 = vector.broadcast %1 : vector<4x1xf32> to vector<4x256xf32>
    %6 = arith.addf %4, %5 : vector<4x256xf32>
    %c0_6 = arith.constant 0 : index
    %c0_7 = arith.constant 0 : index
    %c0_8 = arith.constant 0 : index
    %7 = vector.load %arg5[%c0_6, %c0_7, %c0_8] : memref<2x4x256xf32, #tpu.memory_space<vmem>>, vector<1x4x256xf32>
    %8 = vector.shape_cast %7 : vector<1x4x256xf32> to vector<4x256xf32>
    %9 = vector.shape_cast %6 : vector<4x256xf32> to vector<1x4x256xf32>
    tpu.vector_store %arg5[%c0_6, %c0_7, %c0_8], %9 {strides = array<i32>} : memref<2x4x256xf32, #tpu.memory_space<vmem>>, vector<1x4x256xf32>,
    %c1 = arith.constant 1 : index
    %c0_9 = arith.constant 0 : index
    %c0_10 = arith.constant 0 : index
    %10 = vector.load %arg4[%c1, %c0_9, %c0_10] : memref<2x4x256xf32, #tpu.memory_space<vmem>>, vector<1x4x256xf32>
    %11 = vector.shape_cast %10 : vector<1x4x256xf32> to vector<4x256xf32>
    %cst_11 = arith.constant dense<0.000000e+00> : vector<4x256xf32>
    %12 = tpu.matmul %0, %11, %cst_11 {dimension_numbers = #tpu.dot_dimension_numbers<[1], [0], [0], [1], [0, 0, 1, 1], [], []>} : vector<4x4xf32>, vector<4x256xf32>, vector<4x256xf32> -> vector<4x256xf32>
    %13 = vector.broadcast %1 : vector<4x1xf32> to vector<4x256xf32>
    %14 = arith.addf %12, %13 : vector<4x256xf32>
    %c1_12 = arith.constant 1 : index
    %c0_13 = arith.constant 0 : index
    %c0_14 = arith.constant 0 : index
    %15 = vector.load %arg5[%c1_12, %c0_13, %c0_14] : memref<2x4x256xf32, #tpu.memory_space<vmem>>, vector<1x4x256xf32>
    %16 = vector.shape_cast %15 : vector<1x4x256xf32> to vector<4x256xf32>
    %17 = vector.shape_cast %14 : vector<4x256xf32> to vector<1x4x256xf32>
    tpu.vector_store %arg5[%c1_12, %c0_13, %c0_14], %17 {strides = array<i32>} : memref<2x4x256xf32, #tpu.memory_space<vmem>>, vector<1x4x256xf32>,
    return
  }
  func.func @transform_0(%arg0: i32, %arg1: i32) -> (i32, i32) {
    %c0_i32 = arith.constant 0 : i32
    %c0_i32_0 = arith.constant 0 : i32
    %c0_i32_1 = arith.constant 0 : i32
    return %c0_i32, %c0_i32_0 : i32, i32
  }
  func.func @transform_1(%arg0: i32, %arg1: i32) -> (i32, i32) {
    %c0_i32 = arith.constant 0 : i32
    %c0_i32_0 = arith.constant 0 : i32
    %c0_i32_1 = arith.constant 0 : i32
    return %c0_i32, %c0_i32_0 : i32, i32
  }
  func.func @transform_2(%arg0: i32, %arg1: i32) -> (i32, i32, i32) {
    %c0_i32 = arith.constant 0 : i32
    %c0_i32_0 = arith.constant 0 : i32
    return %arg1, %c0_i32, %arg0 : i32, i32, i32
  }
  func.func @transform_3(%arg0: i32, %arg1: i32) -> (i32, i32, i32) {
    %c0_i32 = arith.constant 0 : i32
    %c0_i32_0 = arith.constant 0 : i32
    return %arg1, %c0_i32, %arg0 : i32, i32, i32
  }
}

</mosaic_0001>

<llo_original>
// kernel: tpu_custom_call.1
$region0: #{tpu_custom_call.1}
  #allocation0 [shape = 'u32[]', space=smem, size = 0x4, offset = 0x4, fixed_abs, tag = 'smem constant byte address 0x4 - core index']
  #allocation1 [shape = 'u32[72,128]{1,0:T(1,128)}', space=vmem, size = 0x9000, scoped, tag = 'internal scratch']
  %s0 = inlined_call_operand.vmem [shape: f32[4,4], index: 0, kind: input, shape index: {}]
  %s1 = inlined_call_operand.vmem [shape: f32[4,1], index: 1, kind: input, shape index: {}]
  %s2 = inlined_call_operand.hbm [shape: f32[2,4,256], index: 2, kind: input, shape index: {}]
  %s3 = inlined_call_operand.hbm [shape: f32[2,4,256], index: 3, kind: output, shape index: {}]
  %s4 = sld [smem:[#allocation0]]
  $region26: #{tpu_custom_call.1} parent=0
    _
  %s6 = ssub.s32 1, %s4
  %s7 = scalar_select 0, %s6, %s4
  $region1: #{tpu_custom_call.1} parent=0
    #allocation2 [shape = 'u8[8192]{0}', space=vmem, size = 0x2000, scoped, tag = 'input window, operand 2, single buffered']
    #allocation3 [shape = 's32[1]{0}', space=sflag, size = 0x4, scoped, tag = 'scoped memory for tpu_custom_call.1']
    #allocation4 [shape = 's32[1]{0}', space=sflag, size = 0x4, scoped, tag = 'scoped memory for tpu_custom_call.1']
    #allocation5 [shape = 'u8[8192]{0}', space=vmem, size = 0x2000, scoped, tag = 'output window, operand 0, single buffered']
    %8 = vsyncpa [#allocation3], 0
    %9 = vsyncpa [#allocation4], 0
    // Predicated region
    $region2: #{tpu_custom_call.1} parent=1 // pred_check
      _
    $region3: #{tpu_custom_call.1} parent=1 // pred_check_branch
      %11 = sbr.rel (0) target = $region5
    $region4: #{tpu_custom_call.1} parent=1 // pred_region
      _
    $region5: #{tpu_custom_call.1} parent=1 // pred_fallthru
      _
    // Predicated region
    $region6: #{tpu_custom_call.1} parent=1 // pred_check
      _
    $region7: #{tpu_custom_call.1} parent=1 // pred_check_branch
      %13 = sbr.rel (0) target = $region9
    $region8: #{tpu_custom_call.1} parent=1 // pred_region
      _
    $region9: #{tpu_custom_call.1} parent=1 // pred_fallthru
      _
    // Predicated region
    $region10: #{tpu_custom_call.1} parent=1 // pred_check
      _
    $region11: #{tpu_custom_call.1} parent=1 // pred_check_branch
      %15 = sbr.rel (0) target = $region13
    $region12: #{tpu_custom_call.1} parent=1 // pred_region
      %17 = vsyncadd [#allocation3], 0
      %s18 = sshll.u32 %s2, 4
      %s19 = int_to_ptr.hbm [resolvable:$true] %s18
      %s20 = sshll.u32 [#allocation2], 4
      %s21 = int_to_ptr.vmem [resolvable:$true] %s20
      %26 = dma.hbm_to_vmem [thread:$0]  %s19, 256, %s21, [#allocation3], 128, 128, 8
    $region13: #{tpu_custom_call.1} parent=1 // pred_fallthru
      _
    // Predicated region
    $region14: #{tpu_custom_call.1} parent=1 // pred_check
      _
    $region15: #{tpu_custom_call.1} parent=1 // pred_check_branch
      %28 = sbr.rel (0) target = $region17
    $region16: #{tpu_custom_call.1} parent=1 // pred_region
      %30 = dma.done [#allocation3], 256
    $region17: #{tpu_custom_call.1} parent=1 // pred_fallthru
      _
    %v31 = vld [vmem:[%s0] sm:$0xf]
    %v32 = vld [vmem:[%s1] sm:$0xf]
    %v33 = vld [vmem:[#allocation2] sm:$0xff]
    %35 = vset.pattern.permute.xlu0 0
    %36 = vperm.xlu0 %35, %v32
    %v37 = vpop.permute.xlu0 %36
    %40 = vst [vmem:[#allocation1] ss:$2 sm:$0xff] %v33
    %v41 = vld.sshfl [vmem:[#allocation1] sm:$0xff pattern:$0x75316420]
    %v42 = vld.sshfl [vmem:[#allocation1 + $0x8] sm:$0xff pattern:$0x75316420]
    %vm43 = vcmask 31744
    %v45 = vsel %vm43, %v31, 0
    %vm47 = vcmask 1043456
    %v48 = vsel %vm47, %v41, 0
    %v50 = vsel %vm47, %v42, 0
    %52 = vmatpush.msra.mxu0 0.0
    %53 = vmatpush.msra.mxu0 0.0
    %54 = vmatpush.msra.mxu0 0.0
    %55 = vmatpush.msra.mxu0 0.0
    %56 = vmatpush.msra.mxu0 0.0
    %57 = vmatpush.msra.mxu0 0.0
    %58 = vmatpush.msra.mxu0 0.0
    %59 = vmatpush.msra.mxu0 0.0
    %60 = vmatpush.msra.mxu0 0.0
    %61 = vmatpush.msra.mxu0 0.0
    %62 = vmatpush.msra.mxu0 0.0
    %63 = vmatpush.msra.mxu0 0.0
    %64 = vmatpush.msra.mxu0 0.0
    %65 = vmatpush.msra.mxu0 0.0
    %66 = vmatpush.msra.mxu0 0.0
    %67 = vmatpush.msra.mxu0 %v48
    %68 = vmatmul.f32.gmra.mxu0 %v45
    %v69 = vpop.f32.mrf.mxu0
    %v70 = vadd.f32 %v37, %v69
    %71 = vdwg.mxu0
    %72 = vmatpush.msra.mxu0 0.0
    %73 = vmatpush.msra.mxu0 0.0
    %74 = vmatpush.msra.mxu0 0.0
    %75 = vmatpush.msra.mxu0 0.0
    %76 = vmatpush.msra.mxu0 0.0
    %77 = vmatpush.msra.mxu0 0.0
    %78 = vmatpush.msra.mxu0 0.0
    %79 = vmatpush.msra.mxu0 0.0
    %80 = vmatpush.msra.mxu0 0.0
    %81 = vmatpush.msra.mxu0 0.0
    %82 = vmatpush.msra.mxu0 0.0
    %83 = vmatpush.msra.mxu0 0.0
    %84 = vmatpush.msra.mxu0 0.0
    %85 = vmatpush.msra.mxu0 0.0
    %86 = vmatpush.msra.mxu0 0.0
    %87 = vmatpush.msra.mxu0 %v50
    %88 = vmatmul.f32.gmra.mxu0 %v45
    %v89 = vpop.f32.mrf.mxu0
    %v90 = vadd.f32 %v37, %v89
    %91 = vdwg.mxu0
    %v94 = vrot.slane %v90, 4
    %v95 = vsel %vm47, %v70, %v94
    %97 = vst [vmem:[#allocation5] sm:$0xff] %v95
    %s98 = scalar_lea.vmem [#allocation2], 8
    %v99 = vld [vmem:[%s98] sm:$0xff]
    %101 = vst [vmem:[#allocation1] ss:$2 sm:$0xff] %v99
    %v102 = vld.sshfl [vmem:[#allocation1] sm:$0xff pattern:$0x75316420]
    %v103 = vld.sshfl [vmem:[#allocation1 + $0x8] sm:$0xff pattern:$0x75316420]
    %v104 = vsel %vm47, %v102, 0
    %v106 = vsel %vm47, %v103, 0
    %108 = vmatpush.msra.mxu0 0.0
    %109 = vmatpush.msra.mxu0 0.0
    %110 = vmatpush.msra.mxu0 0.0
    %111 = vmatpush.msra.mxu0 0.0
    %112 = vmatpush.msra.mxu0 0.0
    %113 = vmatpush.msra.mxu0 0.0
    %114 = vmatpush.msra.mxu0 0.0
    %115 = vmatpush.msra.mxu0 0.0
    %116 = vmatpush.msra.mxu0 0.0
    %117 = vmatpush.msra.mxu0 0.0
    %118 = vmatpush.msra.mxu0 0.0
    %119 = vmatpush.msra.mxu0 0.0
    %120 = vmatpush.msra.mxu0 0.0
    %121 = vmatpush.msra.mxu0 0.0
    %122 = vmatpush.msra.mxu0 0.0
    %123 = vmatpush.msra.mxu0 %v104
    %124 = vmatmul.f32.gmra.mxu0 %v45
    %v125 = vpop.f32.mrf.mxu0
    %v126 = vadd.f32 %v37, %v125
    %127 = vdwg.mxu0
    %128 = vmatpush.msra.mxu0 0.0
    %129 = vmatpush.msra.mxu0 0.0
    %130 = vmatpush.msra.mxu0 0.0
    %131 = vmatpush.msra.mxu0 0.0
    %132 = vmatpush.msra.mxu0 0.0
    %133 = vmatpush.msra.mxu0 0.0
    %134 = vmatpush.msra.mxu0 0.0
    %135 = vmatpush.msra.mxu0 0.0
    %136 = vmatpush.msra.mxu0 0.0
    %137 = vmatpush.msra.mxu0 0.0
    %138 = vmatpush.msra.mxu0 0.0
    %139 = vmatpush.msra.mxu0 0.0
    %140 = vmatpush.msra.mxu0 0.0
    %141 = vmatpush.msra.mxu0 0.0
    %142 = vmatpush.msra.mxu0 0.0
    %143 = vmatpush.msra.mxu0 %v106
    %144 = vmatmul.f32.gmra.mxu0 %v45
    %v145 = vpop.f32.mrf.mxu0
    %v146 = vadd.f32 %v37, %v145
    %147 = vdwg.mxu0
    %v150 = vrot.slane %v146, 4
    %v151 = vsel %vm47, %v126, %v150
    %s153 = scalar_lea.vmem [#allocation5], 8
    %154 = vst [vmem:[%s153] sm:$0xff] %v151
    // Predicated region
    $region18: #{tpu_custom_call.1} parent=1 // pred_check
      _
    $region19: #{tpu_custom_call.1} parent=1 // pred_check_branch
      %156 = sbr.rel (0) target = $region21
    $region20: #{tpu_custom_call.1} parent=1 // pred_region
      %158 = vsyncadd [#allocation4], 0
      %s159 = sshll.u32 [#allocation5], 4
      %s160 = int_to_ptr.vmem [resolvable:$true] %s159
      %s161 = sshll.u32 %s3, 4
      %s162 = int_to_ptr.hbm [resolvable:$true] %s161
      %167 = dma.vmem_to_hbm [thread:$0]  %s160, 256, %s162, [#allocation4], 128, 128, 8
    $region21: #{tpu_custom_call.1} parent=1 // pred_fallthru
      _
    // Predicated region
    $region22: #{tpu_custom_call.1} parent=1 // pred_check
      _
    $region23: #{tpu_custom_call.1} parent=1 // pred_check_branch
      %169 = sbr.rel (0) target = $region25
    $region24: #{tpu_custom_call.1} parent=1 // pred_region
      %171 = dma.done [#allocation4], 256
    $region25: #{tpu_custom_call.1} parent=1 // pred_fallthru
      _
    %172 = vsyncpa [#allocation3], 1
    %173 = vsyncpa [#allocation4], 1

</llo_original>
